<compile_context>
chip_gen: v7x
topology: tpu7x:2x2x1
jax: 0.10.0
libtpu: 0.0.40
codegen_flags: <defaults>
</compile_context>

<pallas_src>
import math

import jax
import jax.numpy as jnp
from jax.experimental import pallas as pl
from jax.experimental.pallas import tpu as pltpu

# ---------------- configuration (small but structurally faithful) ----------------
TOTAL_LOCATIONS = 512          # module default is 3025; reduced for the demo
TIME_SCALE = 48
LOC_DIM, TIM_DIM, STAY_DIM, PRE_DIM = 64, 8, 8, 8
EMB_DIM = LOC_DIM + TIM_DIM + STAY_DIM + PRE_DIM   # 88
HIDDEN = 64                    # hidden_dim == linear_dim (bidirectional=False)
NUM_HEADS = 8
HEAD_DIM = HIDDEN // NUM_HEADS  # 8
NUM_OUT = 4                    # return_prob=True -> output_layer: total_locations -> 4
F32 = jnp.float32


def _round_up(v, m):
    return (v + m - 1) // m * m


EMB_PAD = _round_up(EMB_DIM, 128)          # 88  -> 128 (lane-aligned contraction dim)
L_PAD = _round_up(TOTAL_LOCATIONS, 128)    # 512 -> 512 (3025 -> 3072 at real size)


# ------------------------------- Pallas kernel ------------------------------------
def atnet_kernel(x_ref, wv_ref, bv_ref, wiv_ref, biv_ref, wop_ref, bop_ref,
                 wl_ref, bl_ref, wout_ref, bout_ref, out_ref):
    x = x_ref[...]                                                       # (N, 128) f32

    # V = relu(Linear(x)).  Q and K are mathematically dead for seq-len 1
    # (softmax over a single key is exactly 1), so they are not computed.
    v = jnp.maximum(
        jnp.dot(x, wv_ref[...], preferred_element_type=F32) + bv_ref[...], 0.0)

    # MultiheadAttention: V in-projection; attention weights == 1 -> attn == vp;
    # then the out-projection.
    vp = jnp.dot(v, wiv_ref[...], preferred_element_type=F32) + biv_ref[...]
    h = jnp.dot(vp, wop_ref[...], preferred_element_type=F32) + bop_ref[...]   # (N, 64)

    # linear(hidden -> total_locations_padded): bf16 operands on the MXU,
    # f32 accumulate; bias add + ReLU in f32.
    pred = jnp.dot(h.astype(jnp.bfloat16), wl_ref[...],
                   preferred_element_type=F32) + bl_ref[...]              # (N, L_PAD)
    pred = jnp.maximum(pred, 0.0)

    # output_layer(total_locations_padded -> 4) + softmax over the 4 logits.
    logits = jnp.dot(pred, wout_ref[...], preferred_element_type=F32) + bout_ref[...]
    m = jnp.max(logits, axis=-1, keepdims=True)
    e = jnp.exp(logits - m)
    out_ref[...] = e / jnp.sum(e, axis=-1, keepdims=True)


# ------------------------------- wrapper -------------------------------------------
def atnetwork_forward(params, x_l, x_t, pre_pos_count, stay_time):
    # Embedding gathers (glue, plain JAX), concat -> (N, EMB_DIM), pad to 128 lanes.
    lemb = jnp.take(params['loc_emb'], x_l, axis=0)
    temb = jnp.take(params['tim_emb'], x_t, axis=0)
    semb = jnp.take(params['stay_emb'], stay_time, axis=0)
    pemb = jnp.take(params['pre_emb'], pre_pos_count, axis=0)
    x = jnp.concatenate([lemb, temb, semb, pemb], axis=-1).astype(F32)
    n = x.shape[0]
    x = jnp.pad(x, ((0, 0), (0, EMB_PAD - EMB_DIM)))

    vmem = pl.BlockSpec(memory_space=pltpu.MemorySpace.VMEM)
    # TODO(synk): if batch N becomes large, add an N grid axis marked "parallel"
    # (sized for v7x's 64 MiB VMEM) so the second TensorCore is used; at N=16 a
    # single un-gridded step is fastest.
    return pl.pallas_call(
        atnet_kernel,
        out_shape=jax.ShapeDtypeStruct((n, NUM_OUT), F32),
        in_specs=[vmem] * 11,
        out_specs=vmem,
    )(x,
      params['wv_t'], params['bv'],
      params['wiv_t'], params['biv'],
      params['wop_t'], params['bop'],
      params['wl_t'], params['bl'],
      params['wout_t'], params['bout'])


# -------------------------- parameter init (uniform(-0.1, 0.1)) ---------------------
def init_params(key):
    def u(k, shape):
        return jax.random.uniform(k, shape, F32, -0.1, 0.1)

    def pad_rows(w, rows):
        return jnp.pad(w, ((0, rows - w.shape[0]), (0, 0)))

    def pad_cols(w, cols):
        return jnp.pad(w, ((0, 0), (0, cols - w.shape[1])))

    ks = jax.random.split(key, 22)
    return dict(
        loc_emb=u(ks[0], (TOTAL_LOCATIONS, LOC_DIM)),
        tim_emb=u(ks[1], (TIME_SCALE, TIM_DIM)),
        stay_emb=u(ks[2], (TIME_SCALE, STAY_DIM)),
        pre_emb=u(ks[3], (TIME_SCALE, PRE_DIM)),
        # Pre-transposed (in, out) layouts; biases pre-shaped to (1, out).
        # Q/K (and their in-projections) are kept only for the full-fidelity
        # pure-JAX reference -- they cannot affect the forward output.
        wq_t=u(ks[4], (EMB_DIM, HIDDEN)), bq=u(ks[5], (1, HIDDEN)),
        wk_t=u(ks[6], (EMB_DIM, HIDDEN)), bk=u(ks[7], (1, HIDDEN)),
        wv_t=pad_rows(u(ks[8], (EMB_DIM, HIDDEN)), EMB_PAD), bv=u(ks[9], (1, HIDDEN)),
        wiq_t=u(ks[10], (HIDDEN, HIDDEN)), biq=u(ks[11], (1, HIDDEN)),
        wik_t=u(ks[12], (HIDDEN, HIDDEN)), bik=u(ks[13], (1, HIDDEN)),
        wiv_t=u(ks[14], (HIDDEN, HIDDEN)), biv=u(ks[15], (1, HIDDEN)),
        wop_t=u(ks[16], (HIDDEN, HIDDEN)), bop=u(ks[17], (1, HIDDEN)),
        # Dominant weight stored bf16 (MXU-native), zero-padded to L_PAD columns.
        wl_t=pad_cols(u(ks[18], (HIDDEN, TOTAL_LOCATIONS)), L_PAD).astype(jnp.bfloat16),
        bl=pad_cols(u(ks[19], (1, TOTAL_LOCATIONS)), L_PAD),
        wout_t=pad_rows(u(ks[20], (TOTAL_LOCATIONS, NUM_OUT)), L_PAD),
        bout=u(ks[21], (1, NUM_OUT)),
        # W, Y, home_embedding exist in __init__ but are unused in forward(); omitted.
    )


# --------------------------- pure-JAX reference (for checking) ----------------------
def reference_forward(params, x_l, x_t, pre_pos_count, stay_time):
    relu = jax.nn.relu
    x = jnp.concatenate([params['loc_emb'][x_l], params['tim_emb'][x_t],
                         params['stay_emb'][stay_time], params['pre_emb'][pre_pos_count]], -1)
    q = relu(x @ params['wq_t'] + params['bq'])
    k = relu(x @ params['wk_t'] + params['bk'])
    v = relu(x @ params['wv_t'][:EMB_DIM] + params['bv'])
    qp = q @ params['wiq_t'] + params['biq']
    kp = k @ params['wik_t'] + params['bik']
    vp = v @ params['wiv_t'] + params['biv']
    n = x.shape[0]
    qh = qp.reshape(n, NUM_HEADS, HEAD_DIM)
    kh = kp.reshape(n, NUM_HEADS, HEAD_DIM)
    vh = vp.reshape(n, NUM_HEADS, HEAD_DIM)
    s = (qh * kh).sum(-1, keepdims=True) / math.sqrt(HEAD_DIM)   # key axis has length 1
    w = jax.nn.softmax(s, axis=-1)
    attn = (w * vh).reshape(n, HIDDEN)
    h = attn @ params['wop_t'] + params['bop']
    wl = params['wl_t'].astype(F32)[:, :TOTAL_LOCATIONS]
    pred = relu(h @ wl + params['bl'][:, :TOTAL_LOCATIONS])
    logits = pred @ params['wout_t'][:TOTAL_LOCATIONS] + params['bout']
    return jax.nn.softmax(logits, -1)


if __name__ == "__main__":
    key = jax.random.PRNGKey(0)
    pkey, ikey = jax.random.split(key)
    params = init_params(pkey)

    N = 16
    k1, k2, k3, k4 = jax.random.split(ikey, 4)
    x_l = jax.random.randint(k1, (N,), 0, TOTAL_LOCATIONS)
    x_t = jax.random.randint(k2, (N,), 0, TIME_SCALE)
    pre_pos_count = jax.random.randint(k3, (N,), 0, TIME_SCALE)
    stay_time = jax.random.randint(k4, (N,), 0, TIME_SCALE)

    out = jax.block_until_ready(atnetwork_forward(params, x_l, x_t, pre_pos_count, stay_time))
    ref = reference_forward(params, x_l, x_t, pre_pos_count, stay_time)

    assert out.shape == (N, NUM_OUT), out.shape
    assert bool(jnp.all(jnp.isfinite(out)))
    assert bool(jnp.allclose(jnp.sum(out, -1), 1.0, atol=1e-5))
    # tolerance accounts for the bf16 h @ wl matmul (f32 accumulate)
    assert bool(jnp.allclose(out, ref, rtol=2e-2, atol=2e-3))
    print("KERNEL_OK")
</pallas_src>

<mosaic_0001>
module attributes {stable_mosaic.version = 11 : i64} {
  func.func @atnet_kernel(%arg0: memref<16x128xf32, #tpu.memory_space<vmem>>, %arg1: memref<128x64xf32, #tpu.memory_space<vmem>>, %arg2: memref<1x64xf32, #tpu.memory_space<vmem>>, %arg3: memref<64x64xf32, #tpu.memory_space<vmem>>, %arg4: memref<1x64xf32, #tpu.memory_space<vmem>>, %arg5: memref<64x64xf32, #tpu.memory_space<vmem>>, %arg6: memref<1x64xf32, #tpu.memory_space<vmem>>, %arg7: memref<64x512xbf16, #tpu.memory_space<vmem>>, %arg8: memref<1x512xf32, #tpu.memory_space<vmem>>, %arg9: memref<512x4xf32, #tpu.memory_space<vmem>>, %arg10: memref<1x4xf32, #tpu.memory_space<vmem>>, %arg11: memref<16x4xf32, #tpu.memory_space<vmem>>) attributes {dimension_semantics = [], scalar_prefetch = 0 : i64, scratch_operands = 0 : i64, tpu.core_type = #tpu.core_type<tc>} {
    %c0 = arith.constant 0 : index
    %c0_0 = arith.constant 0 : index
    %0 = vector.load %arg0[%c0, %c0_0] : memref<16x128xf32, #tpu.memory_space<vmem>>, vector<16x128xf32>
    %c0_1 = arith.constant 0 : index
    %c0_2 = arith.constant 0 : index
    %1 = vector.load %arg1[%c0_1, %c0_2] : memref<128x64xf32, #tpu.memory_space<vmem>>, vector<128x64xf32>
    %cst = arith.constant dense<0.000000e+00> : vector<16x64xf32>
    %2 = tpu.matmul %0, %1, %cst {dimension_numbers = #tpu.dot_dimension_numbers<[1], [0], [0], [1], [0, 0, 1, 1], [], []>} : vector<16x128xf32>, vector<128x64xf32>, vector<16x64xf32> -> vector<16x64xf32>
    %c0_3 = arith.constant 0 : index
    %c0_4 = arith.constant 0 : index
    %3 = vector.load %arg2[%c0_3, %c0_4] : memref<1x64xf32, #tpu.memory_space<vmem>>, vector<1x64xf32>
    %4 = vector.broadcast %3 : vector<1x64xf32> to vector<16x64xf32>
    %5 = arith.addf %2, %4 : vector<16x64xf32>
    %cst_5 = arith.constant 0.000000e+00 : f32
    %6 = vector.broadcast %cst_5 : f32 to vector<16x64xf32>
    %7 = arith.maximumf %5, %6 : vector<16x64xf32>
    %c0_6 = arith.constant 0 : index
    %c0_7 = arith.constant 0 : index
    %8 = vector.load %arg3[%c0_6, %c0_7] : memref<64x64xf32, #tpu.memory_space<vmem>>, vector<64x64xf32>
    %cst_8 = arith.constant dense<0.000000e+00> : vector<16x64xf32>
    %9 = tpu.matmul %7, %8, %cst_8 {dimension_numbers = #tpu.dot_dimension_numbers<[1], [0], [0], [1], [0, 0, 1, 1], [], []>} : vector<16x64xf32>, vector<64x64xf32>, vector<16x64xf32> -> vector<16x64xf32>
    %c0_9 = arith.constant 0 : index
    %c0_10 = arith.constant 0 : index
    %10 = vector.load %arg4[%c0_9, %c0_10] : memref<1x64xf32, #tpu.memory_space<vmem>>, vector<1x64xf32>
    %11 = vector.broadcast %10 : vector<1x64xf32> to vector<16x64xf32>
    %12 = arith.addf %9, %11 : vector<16x64xf32>
    %c0_11 = arith.constant 0 : index
    %c0_12 = arith.constant 0 : index
    %13 = vector.load %arg5[%c0_11, %c0_12] : memref<64x64xf32, #tpu.memory_space<vmem>>, vector<64x64xf32>
    %cst_13 = arith.constant dense<0.000000e+00> : vector<16x64xf32>
    %14 = tpu.matmul %12, %13, %cst_13 {dimension_numbers = #tpu.dot_dimension_numbers<[1], [0], [0], [1], [0, 0, 1, 1], [], []>} : vector<16x64xf32>, vector<64x64xf32>, vector<16x64xf32> -> vector<16x64xf32>
    %c0_14 = arith.constant 0 : index
    %c0_15 = arith.constant 0 : index
    %15 = vector.load %arg6[%c0_14, %c0_15] : memref<1x64xf32, #tpu.memory_space<vmem>>, vector<1x64xf32>
    %16 = vector.broadcast %15 : vector<1x64xf32> to vector<16x64xf32>
    %17 = arith.addf %14, %16 : vector<16x64xf32>
    %18 = arith.truncf %17 : vector<16x64xf32> to vector<16x64xbf16>
    %c0_16 = arith.constant 0 : index
    %c0_17 = arith.constant 0 : index
    %19 = vector.load %arg7[%c0_16, %c0_17] : memref<64x512xbf16, #tpu.memory_space<vmem>>, vector<64x512xbf16>
    %cst_18 = arith.constant dense<0.000000e+00> : vector<16x512xf32>
    %20 = tpu.matmul %18, %19, %cst_18 {dimension_numbers = #tpu.dot_dimension_numbers<[1], [0], [0], [1], [0, 0, 1, 1], [], []>} : vector<16x64xbf16>, vector<64x512xbf16>, vector<16x512xf32> -> vector<16x512xf32>
    %c0_19 = arith.constant 0 : index
    %c0_20 = arith.constant 0 : index
    %21 = vector.load %arg8[%c0_19, %c0_20] : memref<1x512xf32, #tpu.memory_space<vmem>>, vector<1x512xf32>
    %22 = vector.broadcast %21 : vector<1x512xf32> to vector<16x512xf32>
    %23 = arith.addf %20, %22 : vector<16x512xf32>
    %cst_21 = arith.constant 0.000000e+00 : f32
    %24 = vector.broadcast %cst_21 : f32 to vector<16x512xf32>
    %25 = arith.maximumf %23, %24 : vector<16x512xf32>
    %c0_22 = arith.constant 0 : index
    %c0_23 = arith.constant 0 : index
    %26 = vector.load %arg9[%c0_22, %c0_23] : memref<512x4xf32, #tpu.memory_space<vmem>>, vector<512x4xf32>
    %cst_24 = arith.constant dense<0.000000e+00> : vector<16x4xf32>
    %27 = tpu.matmul %25, %26, %cst_24 {dimension_numbers = #tpu.dot_dimension_numbers<[1], [0], [0], [1], [0, 0, 1, 1], [], []>} : vector<16x512xf32>, vector<512x4xf32>, vector<16x4xf32> -> vector<16x4xf32>
    %c0_25 = arith.constant 0 : index
    %c0_26 = arith.constant 0 : index
    %28 = vector.load %arg10[%c0_25, %c0_26] : memref<1x4xf32, #tpu.memory_space<vmem>>, vector<1x4xf32>
    %29 = vector.broadcast %28 : vector<1x4xf32> to vector<16x4xf32>
    %30 = arith.addf %27, %29 : vector<16x4xf32>
    %cst_27 = arith.constant dense<0xFF800000> : vector<16xf32>
    %31 = vector.multi_reduction <maximumf>, %30, %cst_27 [1] : vector<16x4xf32> to vector<16xf32>
    %32 = vector.shape_cast %31 : vector<16xf32> to vector<16x1xf32>
    %33 = vector.broadcast %32 : vector<16x1xf32> to vector<16x4xf32>
    %34 = arith.subf %30, %33 : vector<16x4xf32>
    %35 = math.exp %34 : vector<16x4xf32>
    %cst_28 = arith.constant dense<0.000000e+00> : vector<16xf32>
    %36 = vector.multi_reduction <add>, %35, %cst_28 [1] : vector<16x4xf32> to vector<16xf32>
    %37 = vector.shape_cast %36 : vector<16xf32> to vector<16x1xf32>
    %38 = vector.broadcast %37 : vector<16x1xf32> to vector<16x4xf32>
    %39 = arith.divf %35, %38 : vector<16x4xf32>
    %c0_29 = arith.constant 0 : index
    %c0_30 = arith.constant 0 : index
    %40 = vector.load %arg11[%c0_29, %c0_30] : memref<16x4xf32, #tpu.memory_space<vmem>>, vector<16x4xf32>
    tpu.vector_store %arg11[%c0_29, %c0_30], %39 {strides = array<i32>} : memref<16x4xf32, #tpu.memory_space<vmem>>, vector<16x4xf32>,
    return
  }
}

</mosaic_0001>

<llo_original>
// kernel: tpu_custom_call.1
$region0: #{tpu_custom_call.1}
  #allocation0 [shape = 'u32[]', space=smem, size = 0x4, offset = 0x4, fixed_abs, tag = 'smem constant byte address 0x4 - core index']
  #allocation1 [shape = 'u32[144,128]{1,0:T(1,128)}', space=vmem, size = 0x12000, scoped, tag = 'internal scratch']
  %s0 = inlined_call_operand.vmem [shape: f32[16,128], index: 0, kind: input, shape index: {}]
  %s1 = inlined_call_operand.vmem [shape: f32[128,64], index: 1, kind: input, shape index: {}]
  %s2 = inlined_call_operand.vmem [shape: f32[1,64], index: 2, kind: input, shape index: {}]
  %s3 = inlined_call_operand.vmem [shape: f32[64,64], index: 3, kind: input, shape index: {}]
  %s4 = inlined_call_operand.vmem [shape: f32[1,64], index: 4, kind: input, shape index: {}]
  %s5 = inlined_call_operand.vmem [shape: f32[64,64], index: 5, kind: input, shape index: {}]
  %s6 = inlined_call_operand.vmem [shape: f32[1,64], index: 6, kind: input, shape index: {}]
  %s7 = inlined_call_operand.vmem [shape: bf16[64,512], index: 7, kind: input, shape index: {}]
  %s8 = inlined_call_operand.vmem [shape: f32[1,512], index: 8, kind: input, shape index: {}]
  %s9 = inlined_call_operand.vmem [shape: f32[512,4], index: 9, kind: input, shape index: {}]
  %s10 = inlined_call_operand.vmem [shape: f32[1,4], index: 10, kind: input, shape index: {}]
  %s11 = inlined_call_operand.vmem [shape: f32[16,4], index: 11, kind: output, shape index: {}]
  %s12 = sld [smem:[#allocation0]]
  $region54: #{tpu_custom_call.1} parent=0
    _
  %s14 = ssub.s32 1, %s12
  %s15 = scalar_select 0, %s14, %s12
  // Predicated region
  $region2: #{tpu_custom_call.1} parent=0 // pred_check
    _
  $region3: #{tpu_custom_call.1} parent=0 // pred_check_branch
    %17 = sbr.rel (0) target = $region5
  $region4: #{tpu_custom_call.1} parent=0 // pred_region
    _
  $region5: #{tpu_custom_call.1} parent=0 // pred_fallthru
    _
  // Predicated region
  $region6: #{tpu_custom_call.1} parent=0 // pred_check
    _
  $region7: #{tpu_custom_call.1} parent=0 // pred_check_branch
    %19 = sbr.rel (0) target = $region9
  $region8: #{tpu_custom_call.1} parent=0 // pred_region
    _
  $region9: #{tpu_custom_call.1} parent=0 // pred_fallthru
    _
  // Predicated region
  $region10: #{tpu_custom_call.1} parent=0 // pred_check
    _
  $region11: #{tpu_custom_call.1} parent=0 // pred_check_branch
    %21 = sbr.rel (0) target = $region13
  $region12: #{tpu_custom_call.1} parent=0 // pred_region
    _
  $region13: #{tpu_custom_call.1} parent=0 // pred_fallthru
    _
  // Predicated region
  $region14: #{tpu_custom_call.1} parent=0 // pred_check
    _
  $region15: #{tpu_custom_call.1} parent=0 // pred_check_branch
    %23 = sbr.rel (0) target = $region17
  $region16: #{tpu_custom_call.1} parent=0 // pred_region
    _
  $region17: #{tpu_custom_call.1} parent=0 // pred_fallthru
    _
  // Predicated region
  $region18: #{tpu_custom_call.1} parent=0 // pred_check
    _
  $region19: #{tpu_custom_call.1} parent=0 // pred_check_branch
    %25 = sbr.rel (0) target = $region21
  $region20: #{tpu_custom_call.1} parent=0 // pred_region
    _
  $region21: #{tpu_custom_call.1} parent=0 // pred_fallthru
    _
  // Predicated region
  $region22: #{tpu_custom_call.1} parent=0 // pred_check
    _
  $region23: #{tpu_custom_call.1} parent=0 // pred_check_branch
    %27 = sbr.rel (0) target = $region25
  $region24: #{tpu_custom_call.1} parent=0 // pred_region
    _
  $region25: #{tpu_custom_call.1} parent=0 // pred_fallthru
    _
  // Predicated region
  $region26: #{tpu_custom_call.1} parent=0 // pred_check
    _
  $region27: #{tpu_custom_call.1} parent=0 // pred_check_branch
    %29 = sbr.rel (0) target = $region29
  $region28: #{tpu_custom_call.1} parent=0 // pred_region
    _
  $region29: #{tpu_custom_call.1} parent=0 // pred_fallthru
    _
  // Predicated region
  $region30: #{tpu_custom_call.1} parent=0 // pred_check
    _
  $region31: #{tpu_custom_call.1} parent=0 // pred_check_branch
    %31 = sbr.rel (0) target = $region33
  $region32: #{tpu_custom_call.1} parent=0 // pred_region
    _
  $region33: #{tpu_custom_call.1} parent=0 // pred_fallthru
    _
  // Predicated region
  $region34: #{tpu_custom_call.1} parent=0 // pred_check
    _
  $region35: #{tpu_custom_call.1} parent=0 // pred_check_branch
    %33 = sbr.rel (0) target = $region37
  $region36: #{tpu_custom_call.1} parent=0 // pred_region
    _
  $region37: #{tpu_custom_call.1} parent=0 // pred_fallthru
    _
  // Predicated region
  $region38: #{tpu_custom_call.1} parent=0 // pred_check
    _
  $region39: #{tpu_custom_call.1} parent=0 // pred_check_branch
    %35 = sbr.rel (0) target = $region41
  $region40: #{tpu_custom_call.1} parent=0 // pred_region
    _
  $region41: #{tpu_custom_call.1} parent=0 // pred_fallthru
    _
  // Predicated region
  $region42: #{tpu_custom_call.1} parent=0 // pred_check
    _
  $region43: #{tpu_custom_call.1} parent=0 // pred_check_branch
    %37 = sbr.rel (0) target = $region45
  $region44: #{tpu_custom_call.1} parent=0 // pred_region
    _
  $region45: #{tpu_custom_call.1} parent=0 // pred_fallthru
    _
  %v39 = vld [vmem:[%s0] sm:$0xff]
  %v40 = vld [vmem:[%s0 + $0x8] sm:$0xff]
  %v41 = vld [vmem:[%s1] sm:$0xff]
  %v42 = vld [vmem:[%s1 + $0x8] sm:$0xff]
  %v43 = vld [vmem:[%s1 + $0x10] sm:$0xff]
  %v44 = vld [vmem:[%s1 + $0x18] sm:$0xff]
  %v45 = vld [vmem:[%s1 + $0x20] sm:$0xff]
  %v46 = vld [vmem:[%s1 + $0x28] sm:$0xff]
  %v47 = vld [vmem:[%s1 + $0x30] sm:$0xff]
  %v48 = vld [vmem:[%s1 + $0x38] sm:$0xff]
  %v49 = vld [vmem:[%s1 + $0x40] sm:$0xff]
  %v50 = vld [vmem:[%s1 + $0x48] sm:$0xff]
  %v51 = vld [vmem:[%s1 + $0x50] sm:$0xff]
  %v52 = vld [vmem:[%s1 + $0x58] sm:$0xff]
  %v53 = vld [vmem:[%s1 + $0x60] sm:$0xff]
  %v54 = vld [vmem:[%s1 + $0x68] sm:$0xff]
  %v55 = vld [vmem:[%s1 + $0x70] sm:$0xff]
  %v56 = vld [vmem:[%s1 + $0x78] sm:$0xff]
  %v57 = vld [vmem:[%s2] sm:$0x1]
  %v59 = vlaneseq
  %v60 = vshrl.u32 %v59, 7
  %v61 = vsub.s32 0, %v60
  %v62 = vrot.slane %v57, %v61
  %64 = vmatprep.subr.mxu0 0.0
  %65 = vmatpush1.msra.mxu0 %v41
  %66 = vmatprep.subr.mxu0 0.0
  %67 = vmatpush1.msra.mxu0 %v42
  %68 = vmatprep.subr.mxu0 0.0
  %69 = vmatpush1.msra.mxu0 %v43
  %70 = vmatprep.subr.mxu0 0.0
  %71 = vmatpush1.msra.mxu0 %v44
  %72 = vmatprep.subr.mxu0 0.0
  %73 = vmatpush1.msra.mxu0 %v45
  %74 = vmatprep.subr.mxu0 0.0
  %75 = vmatpush1.msra.mxu0 %v46
  %76 = vmatprep.subr.mxu0 0.0
  %77 = vmatpush1.msra.mxu0 %v47
  %78 = vmatprep.subr.mxu0 0.0
  %79 = vmatpush1.msra.mxu0 %v48
  %80 = vmatprep.subr.mxu0 0.0
  %81 = vmatpush1.msra.mxu0 %v49
  %82 = vmatprep.subr.mxu0 0.0
  %83 = vmatpush1.msra.mxu0 %v50
  %84 = vmatprep.subr.mxu0 0.0
  %85 = vmatpush1.msra.mxu0 %v51
  %86 = vmatprep.subr.mxu0 0.0
  %87 = vmatpush1.msra.mxu0 %v52
  %88 = vmatprep.subr.mxu0 0.0
  %89 = vmatpush1.msra.mxu0 %v53
  %90 = vmatprep.subr.mxu0 0.0
  %91 = vmatpush1.msra.mxu0 %v54
  %92 = vmatprep.subr.mxu0 0.0
  %93 = vmatpush1.msra.mxu0 %v55
  %94 = vmatprep.subr.mxu0 0.0
  %95 = vmatpush1.msra.mxu0 %v56
  %96 = vmatprep.subr.mxu0 0.0
  %97 = vmatpush1.msra.mxu0 0.0
  %98 = vmatprep.subr.mxu0 0.0
  %99 = vmatpush1.msra.mxu0 0.0
  %100 = vmatprep.subr.mxu0 0.0
  %101 = vmatpush1.msra.mxu0 0.0
  %102 = vmatprep.subr.mxu0 0.0
  %103 = vmatpush1.msra.mxu0 0.0
  %104 = vmatprep.subr.mxu0 0.0
  %105 = vmatpush1.msra.mxu0 0.0
  %106 = vmatprep.subr.mxu0 0.0
  %107 = vmatpush1.msra.mxu0 0.0
  %108 = vmatprep.subr.mxu0 0.0
  %109 = vmatpush1.msra.mxu0 0.0
  %110 = vmatprep.subr.mxu0 0.0
  %111 = vmatpush1.msra.mxu0 0.0
  %112 = vmatprep.subr.mxu0 0.0
  %113 = vmatpush1.msra.mxu0 0.0
  %114 = vmatprep.subr.mxu0 0.0
  %115 = vmatpush1.msra.mxu0 0.0
  %116 = vmatprep.subr.mxu0 0.0
  %117 = vmatpush1.msra.mxu0 0.0
  %118 = vmatprep.subr.mxu0 0.0
  %119 = vmatpush1.msra.mxu0 0.0
  %120 = vmatprep.subr.mxu0 0.0
  %121 = vmatpush1.msra.mxu0 0.0
  %122 = vmatprep.subr.mxu0 0.0
  %123 = vmatpush1.msra.mxu0 0.0
  %124 = vmatprep.subr.mxu0 0.0
  %125 = vmatpush1.msra.mxu0 0.0
  %126 = vmatprep.subr.mxu0 0.0
  %127 = vmatpush1.msra.mxu0 0.0
  %128 = vmatprep.mubr.f32.mxu0 0.0
  %129 = vmatmul.mubr.f32.gmra.mrb[0].mxu0 %v39
  %v130 = vpop.f32.mrb[0].mxu0
  %v131 = vadd.f32 %v62, %v130
  %v132 = vpop.f32.mrb[0].mxu0
  %133 = vmatprep.mubr.f32.mxu0 0.0
  %134 = vmatmul.mubr.f32.gmra.mrb[0].mxu0 %v40
  %v135 = vpop.f32.mrb[0].mxu0
  %v136 = vadd.f32 %v62, %v135
  %v137 = vpop.f32.mrb[0].mxu0
  %138 = vdwg.mxu0
  %v139 = vmax.f32 %v131, 0.0
  %v140 = vmax.f32 %v136, 0.0
  %v141 = vld [vmem:[%s3] sm:$0xff]
  %v142 = vld [vmem:[%s3 + $0x8] sm:$0xff]
  %v143 = vld [vmem:[%s3 + $0x10] sm:$0xff]
  %v144 = vld [vmem:[%s3 + $0x18] sm:$0xff]
  %v145 = vld [vmem:[%s3 + $0x20] sm:$0xff]
  %v146 = vld [vmem:[%s3 + $0x28] sm:$0xff]
  %v147 = vld [vmem:[%s3 + $0x30] sm:$0xff]
  %v148 = vld [vmem:[%s3 + $0x38] sm:$0xff]
  %v149 = vld [vmem:[%s4] sm:$0x1]
  %v151 = vlaneseq
  %v152 = vshrl.u32 %v151, 7
  %v153 = vsub.s32 0, %v152
  %v154 = vrot.slane %v149, %v153
  %vm156 = vcmask 523264
  %v158 = vsel %vm156, %v139, 0
  %v161 = vsel %vm156, %v140, 0
  %163 = vmatprep.subr.mxu0 0.0
  %164 = vmatpush1.msra.mxu0 %v141
  %165 = vmatprep.subr.mxu0 0.0
  %166 = vmatpush1.msra.mxu0 %v142
  %167 = vmatprep.subr.mxu0 0.0
  %168 = vmatpush1.msra.mxu0 %v143
  %169 = vmatprep.subr.mxu0 0.0
  %170 = vmatpush1.msra.mxu0 %v144
  %171 = vmatprep.subr.mxu0 0.0
  %172 = vmatpush1.msra.mxu0 %v145
  %173 = vmatprep.subr.mxu0 0.0
  %174 = vmatpush1.msra.mxu0 %v146
  %175 = vmatprep.subr.mxu0 0.0
  %176 = vmatpush1.msra.mxu0 %v147
  %177 = vmatprep.subr.mxu0 0.0
  %178 = vmatpush1.msra.mxu0 %v148
  %179 = vmatprep.subr.mxu0 0.0
  %180 = vmatpush1.msra.mxu0 0.0
  %181 = vmatprep.subr.mxu0 0.0
  %182 = vmatpush1.msra.mxu0 0.0
  %183 = vmatprep.subr.mxu0 0.0
  %184 = vmatpush1.msra.mxu0 0.0
  %185 = vmatprep.subr.mxu0 0.0
  %186 = vmatpush1.msra.mxu0 0.0
  %187 = vmatprep.subr.mxu0 0.0
  %188 = vmatpush1.msra.mxu0 0.0
  %189 = vmatprep.subr.mxu0 0.0
  %190 = vmatpush1.msra.mxu0 0.0
  %191 = vmatprep.subr.mxu0 0.0
  %192 = vmatpush1.msra.mxu0 0.0
  %193 = vmatprep.subr.mxu0 0.0
  %194 = vmatpush1.msra.mxu0 0.0
  %195 = vmatprep.subr.mxu0 0.0
  %196 = vmatpush1.msra.mxu0 0.0
  %197 = vmatprep.subr.mxu0 0.0
  %198 = vmatpush1.msra.mxu0 0.0
  %199 = vmatprep.subr.mxu0 0.0
  %200 = vmatpush1.msra.mxu0 0.0
  %201 = vmatprep.subr.mxu0 0.0
  %202 = vmatpush1.msra.mxu0 0.0
  %203 = vmatprep.subr.mxu0 0.0
  %204 = vmatpush1.msra.mxu0 0.0
  %205 = vmatprep.subr.mxu0 0.0
  %206 = vmatpush1.msra.mxu0 0.0
  %207 = vmatprep.subr.mxu0 0.0
  %208 = vmatpush1.msra.mxu0 0.0
  %209 = vmatprep.subr.mxu0 0.0
  %210 = vmatpush1.msra.mxu0 0.0
  %211 = vmatprep.subr.mxu0 0.0
  %212 = vmatpush1.msra.mxu0 0.0
  %213 = vmatprep.subr.mxu0 0.0
  %214 = vmatpush1.msra.mxu0 0.0
  %215 = vmatprep.subr.mxu0 0.0
  %216 = vmatpush1.msra.mxu0 0.0
  %217 = vmatprep.subr.mxu0 0.0
  %218 = vmatpush1.msra.mxu0 0.0
  %219 = vmatprep.subr.mxu0 0.0
  %220 = vmatpush1.msra.mxu0 0.0
  %221 = vmatprep.subr.mxu0 0.0
  %222 = vmatpush1.msra.mxu0 0.0
  %223 = vmatprep.subr.mxu0 0.0
  %224 = vmatpush1.msra.mxu0 0.0
  %225 = vmatprep.subr.mxu0 0.0
  %226 = vmatpush1.msra.mxu0 0.0
  %227 = vmatprep.mubr.f32.mxu0 0.0
  %228 = vmatmul.mubr.f32.gmra.mrb[0].mxu0 %v158
  %v229 = vpop.f32.mrb[0].mxu0
  %v230 = vadd.f32 %v154, %v229
  %v231 = vpop.f32.mrb[0].mxu0
  %232 = vmatprep.mubr.f32.mxu0 0.0
  %233 = vmatmul.mubr.f32.gmra.mrb[0].mxu0 %v161
  %v234 = vpop.f32.mrb[0].mxu0
  %v235 = vadd.f32 %v154, %v234
  %v236 = vpop.f32.mrb[0].mxu0
  %237 = vdwg.mxu0
  %v238 = vld [vmem:[%s5] sm:$0xff]
  %v239 = vld [vmem:[%s5 + $0x8] sm:$0xff]
  %v240 = vld [vmem:[%s5 + $0x10] sm:$0xff]
  %v241 = vld [vmem:[%s5 + $0x18] sm:$0xff]
  %v242 = vld [vmem:[%s5 + $0x20] sm:$0xff]
  %v243 = vld [vmem:[%s5 + $0x28] sm:$0xff]
  %v244 = vld [vmem:[%s5 + $0x30] sm:$0xff]
  %v245 = vld [vmem:[%s5 + $0x38] sm:$0xff]
  %v246 = vld [vmem:[%s6] sm:$0x1]
  %v248 = vlaneseq
  %v249 = vshrl.u32 %v248, 7
  %v250 = vsub.s32 0, %v249
  %v251 = vrot.slane %v246, %v250
  %v254 = vsel %vm156, %v230, 0
  %v257 = vsel %vm156, %v235, 0
  %259 = vmatprep.subr.mxu0 0.0
  %260 = vmatpush1.msra.mxu0 %v238
  %261 = vmatprep.subr.mxu0 0.0
  %262 = vmatpush1.msra.mxu0 %v239
  %263 = vmatprep.subr.mxu0 0.0
  %264 = vmatpush1.msra.mxu0 %v240
  %265 = vmatprep.subr.mxu0 0.0
  %266 = vmatpush1.msra.mxu0 %v241
  %267 = vmatprep.subr.mxu0 0.0
  %268 = vmatpush1.msra.mxu0 %v242
  %269 = vmatprep.subr.mxu0 0.0
  %270 = vmatpush1.msra.mxu0 %v243
  %271 = vmatprep.subr.mxu0 0.0
  %272 = vmatpush1.msra.mxu0 %v244
  %273 = vmatprep.subr.mxu0 0.0
  %274 = vmatpush1.msra.mxu0 %v245
  %275 = vmatprep.subr.mxu0 0.0
  %276 = vmatpush1.msra.mxu0 0.0
  %277 = vmatprep.subr.mxu0 0.0
  %278 = vmatpush1.msra.mxu0 0.0
  %279 = vmatprep.subr.mxu0 0.0
  %280 = vmatpush1.msra.mxu0 0.0
  %281 = vmatprep.subr.mxu0 0.0
  %282 = vmatpush1.msra.mxu0 0.0
  %283 = vmatprep.subr.mxu0 0.0
  %284 = vmatpush1.msra.mxu0 0.0
  %285 = vmatprep.subr.mxu0 0.0
  %286 = vmatpush1.msra.mxu0 0.0
  %287 = vmatprep.subr.mxu0 0.0
  %288 = vmatpush1.msra.mxu0 0.0
  %289 = vmatprep.subr.mxu0 0.0
  %290 = vmatpush1.msra.mxu0 0.0
  %291 = vmatprep.subr.mxu0 0.0
  %292 = vmatpush1.msra.mxu0 0.0
  %293 = vmatprep.subr.mxu0 0.0
  %294 = vmatpush1.msra.mxu0 0.0
  %295 = vmatprep.subr.mxu0 0.0
  %296 = vmatpush1.msra.mxu0 0.0
  %297 = vmatprep.subr.mxu0 0.0
  %298 = vmatpush1.msra.mxu0 0.0
  %299 = vmatprep.subr.mxu0 0.0
  %300 = vmatpush1.msra.mxu0 0.0
  %301 = vmatprep.subr.mxu0 0.0
  %302 = vmatpush1.msra.mxu0 0.0
  %303 = vmatprep.subr.mxu0 0.0
  %304 = vmatpush1.msra.mxu0 0.0
  %305 = vmatprep.subr.mxu0 0.0
  %306 = vmatpush1.msra.mxu0 0.0
  %307 = vmatprep.subr.mxu0 0.0
  %308 = vmatpush1.msra.mxu0 0.0
  %309 = vmatprep.subr.mxu0 0.0
  %310 = vmatpush1.msra.mxu0 0.0
  %311 = vmatprep.subr.mxu0 0.0
  %312 = vmatpush1.msra.mxu0 0.0
  %313 = vmatprep.subr.mxu0 0.0
  %314 = vmatpush1.msra.mxu0 0.0
  %315 = vmatprep.subr.mxu0 0.0
  %316 = vmatpush1.msra.mxu0 0.0
  %317 = vmatprep.subr.mxu0 0.0
  %318 = vmatpush1.msra.mxu0 0.0
  %319 = vmatprep.subr.mxu0 0.0
  %320 = vmatpush1.msra.mxu0 0.0
  %321 = vmatprep.subr.mxu0 0.0
  %322 = vmatpush1.msra.mxu0 0.0
  %323 = vmatprep.mubr.f32.mxu0 0.0
  %324 = vmatmul.mubr.f32.gmra.mrb[0].mxu0 %v254
  %v325 = vpop.f32.mrb[0].mxu0
  %v326 = vadd.f32 %v251, %v325
  %v327 = vpop.f32.mrb[0].mxu0
  %328 = vmatprep.mubr.f32.mxu0 0.0
  %329 = vmatmul.mubr.f32.gmra.mrb[0].mxu0 %v257
  %v330 = vpop.f32.mrb[0].mxu0
  %v331 = vadd.f32 %v251, %v330
  %v332 = vpop.f32.mrb[0].mxu0
  %333 = vdwg.mxu0
  %v334 = vpack.c.bf16 %v331, %v326
  %v335 = vld [vmem:[%s7] sm:$0xff]
  %v336 = vld [vmem:[%s7 + $0x8] sm:$0xff]
  %v337 = vld [vmem:[%s7 + $0x10] sm:$0xff]
  %v338 = vld [vmem:[%s7 + $0x18] sm:$0xff]
  %v339 = vld [vmem:[%s7 + $0x20] sm:$0xff]
  %v340 = vld [vmem:[%s7 + $0x28] sm:$0xff]
  %v341 = vld [vmem:[%s7 + $0x30] sm:$0xff]
  %v342 = vld [vmem:[%s7 + $0x38] sm:$0xff]
  %v343 = vld [vmem:[%s7 + $0x40] sm:$0xff]
  %v344 = vld [vmem:[%s7 + $0x48] sm:$0xff]
  %v345 = vld [vmem:[%s7 + $0x50] sm:$0xff]
  %v346 = vld [vmem:[%s7 + $0x58] sm:$0xff]
  %v347 = vld [vmem:[%s7 + $0x60] sm:$0xff]
  %v348 = vld [vmem:[%s7 + $0x68] sm:$0xff]
  %v349 = vld [vmem:[%s7 + $0x70] sm:$0xff]
  %v350 = vld [vmem:[%s7 + $0x78] sm:$0xff]
  %v351 = vld [vmem:[%s8] sm:$0xf]
  %v353 = vlaneseq
  %v354 = vshrl.u32 %v353, 7
  %v355 = vsub.s32 0, %v354
  %v356 = vrot.slane %v351, %v355
  %v357 = vlaneseq
  %v358 = vshrl.u32 %v357, 7
  %v359 = vsub.s32 1, %v358
  %v360 = vrot.slane %v351, %v359
  %v361 = vlaneseq
  %v362 = vshrl.u32 %v361, 7
  %v363 = vsub.s32 2, %v362
  %v364 = vrot.slane %v351, %v363
  %v365 = vlaneseq
  %v366 = vshrl.u32 %v365, 7
  %v367 = vsub.s32 3, %v366
  %v368 = vrot.slane %v351, %v367
  %v389 = vunpack.c.l.b16 %v335
  %v390 = vunpack.c.h.b16 %v335
  %v391 = vunpack.c.l.b16 %v336
  %v392 = vunpack.c.h.b16 %v336
  %v393 = vunpack.c.l.b16 %v337
  %v394 = vunpack.c.h.b16 %v337
  %v395 = vunpack.c.l.b16 %v338
  %v396 = vunpack.c.h.b16 %v338
  %v397 = vunpack.c.l.b16 %v339
  %v398 = vunpack.c.h.b16 %v339
  %v399 = vunpack.c.l.b16 %v340
  %v400 = vunpack.c.h.b16 %v340
  %v401 = vunpack.c.l.b16 %v341
  %v402 = vunpack.c.h.b16 %v341
  %v403 = vunpack.c.l.b16 %v342
  %v404 = vunpack.c.h.b16 %v342
  %v405 = vunpack.c.l.b16 %v343
  %v406 = vunpack.c.h.b16 %v343
  %v407 = vunpack.c.l.b16 %v344
  %v408 = vunpack.c.h.b16 %v344
  %v409 = vunpack.c.l.b16 %v345
  %v410 = vunpack.c.h.b16 %v345
  %v411 = vunpack.c.l.b16 %v346
  %v412 = vunpack.c.h.b16 %v346
  %v413 = vunpack.c.l.b16 %v347
  %v414 = vunpack.c.h.b16 %v347
  %v415 = vunpack.c.l.b16 %v348
  %v416 = vunpack.c.h.b16 %v348
  %v417 = vunpack.c.l.b16 %v349
  %v418 = vunpack.c.h.b16 %v349
  %v419 = vunpack.c.l.b16 %v350
  %v420 = vunpack.c.h.b16 %v350
  %v421 = vpack.c.b16 %v393, %v389
  %v422 = vpack.c.b16 %v394, %v390
  %v423 = vpack.c.b16 %v395, %v391
  %v424 = vpack.c.b16 %v396, %v392
  %v425 = vpack.c.b16 %v401, %v397
  %v426 = vpack.c.b16 %v402, %v398
  %v427 = vpack.c.b16 %v403, %v399
  %v428 = vpack.c.b16 %v404, %v400
  %v429 = vpack.c.b16 %v409, %v405
  %v430 = vpack.c.b16 %v410, %v406
  %v431 = vpack.c.b16 %v411, %v407
  %v432 = vpack.c.b16 %v412, %v408
  %v433 = vpack.c.b16 %v417, %v413
  %v434 = vpack.c.b16 %v418, %v414
  %v435 = vpack.c.b16 %v419, %v415
  %v436 = vpack.c.b16 %v420, %v416
  %v454 = vsel %vm156, %v334, 0
  %456 = vmatprep.subr.bf16.mxu0 %v422
  %457 = vmatpush1.bf16.msra.mxu0 %v421
  %458 = vmatprep.subr.bf16.mxu0 %v426
  %459 = vmatpush1.bf16.msra.mxu0 %v425
  %460 = vmatprep.subr.bf16.mxu0 %v430
  %461 = vmatpush1.bf16.msra.mxu0 %v429
  %462 = vmatprep.subr.bf16.mxu0 %v434
  %463 = vmatpush1.bf16.msra.mxu0 %v433
  %464 = vmatprep.subr.bf16.mxu0 0
  %465 = vmatpush1.bf16.msra.mxu0 0
  %466 = vmatprep.subr.bf16.mxu0 0
  %467 = vmatpush1.bf16.msra.mxu0 0
  %468 = vmatprep.subr.bf16.mxu0 0
  %469 = vmatpush1.bf16.msra.mxu0 0
  %470 = vmatprep.subr.bf16.mxu0 0
  %471 = vmatpush1.bf16.msra.mxu0 0
  %472 = vmatprep.subr.bf16.mxu0 0
  %473 = vmatpush1.bf16.msra.mxu0 0
  %474 = vmatprep.subr.bf16.mxu0 0
  %475 = vmatpush1.bf16.msra.mxu0 0
  %476 = vmatprep.subr.bf16.mxu0 0
  %477 = vmatpush1.bf16.msra.mxu0 0
  %478 = vmatprep.subr.bf16.mxu0 0
  %479 = vmatpush1.bf16.msra.mxu0 0
  %480 = vmatprep.subr.bf16.mxu0 0
  %481 = vmatpush1.bf16.msra.mxu0 0
  %482 = vmatprep.subr.bf16.mxu0 0
  %483 = vmatpush1.bf16.msra.mxu0 0
  %484 = vmatprep.subr.bf16.mxu0 0
  %485 = vmatpush1.bf16.msra.mxu0 0
  %486 = vmatprep.subr.bf16.mxu0 0
  %487 = vmatpush1.bf16.msra.mxu0 0
  %488 = vmatprep.mubr.bf16.mxu0 0
  %489 = vmatmul.mubr.bf16.gmra.mrb[0].mxu0 %v454
  %v490 = vpop.f32.mrb[0].mxu0
  %v491 = vadd.f32 %v356, %v490
  %v492 = vpop.f32.mrb[0].mxu0
  %v493 = vadd.f32 %v360, %v492
  %v494 = vpop.f32.mrb[0].mxu0
  %v495 = vadd.f32 %v356, %v494
  %v496 = vpop.f32.mrb[0].mxu0
  %v497 = vadd.f32 %v360, %v496
  %498 = vdwg.mxu0
  %499 = vmatprep.subr.bf16.mxu0 %v424
  %500 = vmatpush1.bf16.msra.mxu0 %v423
  %501 = vmatprep.subr.bf16.mxu0 %v428
  %502 = vmatpush1.bf16.msra.mxu0 %v427
  %503 = vmatprep.subr.bf16.mxu0 %v432
  %504 = vmatpush1.bf16.msra.mxu0 %v431
  %505 = vmatprep.subr.bf16.mxu0 %v436
  %506 = vmatpush1.bf16.msra.mxu0 %v435
  %507 = vmatprep.subr.bf16.mxu0 0
  %508 = vmatpush1.bf16.msra.mxu0 0
  %509 = vmatprep.subr.bf16.mxu0 0
  %510 = vmatpush1.bf16.msra.mxu0 0
  %511 = vmatprep.subr.bf16.mxu0 0
  %512 = vmatpush1.bf16.msra.mxu0 0
  %513 = vmatprep.subr.bf16.mxu0 0
  %514 = vmatpush1.bf16.msra.mxu0 0
  %515 = vmatprep.subr.bf16.mxu0 0
  %516 = vmatpush1.bf16.msra.mxu0 0
  %517 = vmatprep.subr.bf16.mxu0 0
  %518 = vmatpush1.bf16.msra.mxu0 0
  %519 = vmatprep.subr.bf16.mxu0 0
  %520 = vmatpush1.bf16.msra.mxu0 0
  %521 = vmatprep.subr.bf16.mxu0 0
  %522 = vmatpush1.bf16.msra.mxu0 0
  %523 = vmatprep.subr.bf16.mxu0 0
  %524 = vmatpush1.bf16.msra.mxu0 0
  %525 = vmatprep.subr.bf16.mxu0 0
  %526 = vmatpush1.bf16.msra.mxu0 0
  %527 = vmatprep.subr.bf16.mxu0 0
  %528 = vmatpush1.bf16.msra.mxu0 0
  %529 = vmatprep.subr.bf16.mxu0 0
  %530 = vmatpush1.bf16.msra.mxu0 0
  %531 = vmatprep.mubr.bf16.mxu0 0
  %532 = vmatmul.mubr.bf16.gmra.mrb[0].mxu0 %v454
  %v533 = vpop.f32.mrb[0].mxu0
  %v534 = vadd.f32 %v364, %v533
  %v535 = vpop.f32.mrb[0].mxu0
  %v536 = vadd.f32 %v368, %v535
  %v537 = vpop.f32.mrb[0].mxu0
  %v538 = vadd.f32 %v364, %v537
  %v539 = vpop.f32.mrb[0].mxu0
  %v540 = vadd.f32 %v368, %v539
  %541 = vdwg.mxu0
  %v542 = vmax.f32 %v491, 0.0
  %v543 = vmax.f32 %v493, 0.0
  %v544 = vmax.f32 %v534, 0.0
  %v545 = vmax.f32 %v536, 0.0
  %v546 = vmax.f32 %v495, 0.0
  %v547 = vmax.f32 %v497, 0.0
  %v548 = vmax.f32 %v538, 0.0
  %v549 = vmax.f32 %v540, 0.0
  %v550 = vld [vmem:[%s9] sm:$0xff]
  %v551 = vld [vmem:[%s9 + $0x8] sm:$0xff]
  %v552 = vld [vmem:[%s9 + $0x10] sm:$0xff]
  %v553 = vld [vmem:[%s9 + $0x18] sm:$0xff]
  %v554 = vld [vmem:[%s9 + $0x20] sm:$0xff]
  %v555 = vld [vmem:[%s9 + $0x28] sm:$0xff]
  %v556 = vld [vmem:[%s9 + $0x30] sm:$0xff]
  %v557 = vld [vmem:[%s9 + $0x38] sm:$0xff]
  %v558 = vld [vmem:[%s9 + $0x40] sm:$0xff]
  %v559 = vld [vmem:[%s9 + $0x48] sm:$0xff]
  %v560 = vld [vmem:[%s9 + $0x50] sm:$0xff]
  %v561 = vld [vmem:[%s9 + $0x58] sm:$0xff]
  %v562 = vld [vmem:[%s9 + $0x60] sm:$0xff]
  %v563 = vld [vmem:[%s9 + $0x68] sm:$0xff]
  %v564 = vld [vmem:[%s9 + $0x70] sm:$0xff]
  %v565 = vld [vmem:[%s9 + $0x78] sm:$0xff]
  %v566 = vld [vmem:[%s9 + $0x80] sm:$0xff]
  %v567 = vld [vmem:[%s9 + $0x88] sm:$0xff]
  %v568 = vld [vmem:[%s9 + $0x90] sm:$0xff]
  %v569 = vld [vmem:[%s9 + $0x98] sm:$0xff]
  %v570 = vld [vmem:[%s9 + $0xa0] sm:$0xff]
  %v571 = vld [vmem:[%s9 + $0xa8] sm:$0xff]
  %v572 = vld [vmem:[%s9 + $0xb0] sm:$0xff]
  %v573 = vld [vmem:[%s9 + $0xb8] sm:$0xff]
  %v574 = vld [vmem:[%s9 + $0xc0] sm:$0xff]
  %v575 = vld [vmem:[%s9 + $0xc8] sm:$0xff]
  %v576 = vld [vmem:[%s9 + $0xd0] sm:$0xff]
  %v577 = vld [vmem:[%s9 + $0xd8] sm:$0xff]
  %v578 = vld [vmem:[%s9 + $0xe0] sm:$0xff]
  %v579 = vld [vmem:[%s9 + $0xe8] sm:$0xff]
  %v580 = vld [vmem:[%s9 + $0xf0] sm:$0xff]
  %v581 = vld [vmem:[%s9 + $0xf8] sm:$0xff]
  %v582 = vld [vmem:[%s9 + $0x100] sm:$0xff]
  %v583 = vld [vmem:[%s9 + $0x108] sm:$0xff]
  %v584 = vld [vmem:[%s9 + $0x110] sm:$0xff]
  %v585 = vld [vmem:[%s9 + $0x118] sm:$0xff]
  %v586 = vld [vmem:[%s9 + $0x120] sm:$0xff]
  %v587 = vld [vmem:[%s9 + $0x128] sm:$0xff]
  %v588 = vld [vmem:[%s9 + $0x130] sm:$0xff]
  %v589 = vld [vmem:[%s9 + $0x138] sm:$0xff]
  %v590 = vld [vmem:[%s9 + $0x140] sm:$0xff]
  %v591 = vld [vmem:[%s9 + $0x148] sm:$0xff]
  %v592 = vld [vmem:[%s9 + $0x150] sm:$0xff]
  %v593 = vld [vmem:[%s9 + $0x158] sm:$0xff]
  %v594 = vld [vmem:[%s9 + $0x160] sm:$0xff]
  %v595 = vld [vmem:[%s9 + $0x168] sm:$0xff]
  %v596 = vld [vmem:[%s9 + $0x170] sm:$0xff]
  %v597 = vld [vmem:[%s9 + $0x178] sm:$0xff]
  %v598 = vld [vmem:[%s9 + $0x180] sm:$0xff]
  %v599 = vld [vmem:[%s9 + $0x188] sm:$0xff]
  %v600 = vld [vmem:[%s9 + $0x190] sm:$0xff]
  %v601 = vld [vmem:[%s9 + $0x198] sm:$0xff]
  %v602 = vld [vmem:[%s9 + $0x1a0] sm:$0xff]
  %v603 = vld [vmem:[%s9 + $0x1a8] sm:$0xff]
  %v604 = vld [vmem:[%s9 + $0x1b0] sm:$0xff]
  %v605 = vld [vmem:[%s9 + $0x1b8] sm:$0xff]
  %v606 = vld [vmem:[%s9 + $0x1c0] sm:$0xff]
  %v607 = vld [vmem:[%s9 + $0x1c8] sm:$0xff]
  %v608 = vld [vmem:[%s9 + $0x1d0] sm:$0xff]
  %v609 = vld [vmem:[%s9 + $0x1d8] sm:$0xff]
  %v610 = vld [vmem:[%s9 + $0x1e0] sm:$0xff]
  %v611 = vld [vmem:[%s9 + $0x1e8] sm:$0xff]
  %v612 = vld [vmem:[%s9 + $0x1f0] sm:$0xff]
  %v613 = vld [vmem:[%s9 + $0x1f8] sm:$0xff]
  %v614 = vld [vmem:[%s10] sm:$0x1]
  %v616 = vlaneseq
  %v617 = vshrl.u32 %v616, 7
  %v618 = vsub.s32 0, %v617
  %v619 = vrot.slane %v614, %v618
  %621 = vmatprep.subr.mxu0 0.0
  %622 = vmatpush1.msra.mxu0 %v550
  %623 = vmatprep.subr.mxu0 0.0
  %624 = vmatpush1.msra.mxu0 %v551
  %625 = vmatprep.subr.mxu0 0.0
  %626 = vmatpush1.msra.mxu0 %v552
  %627 = vmatprep.subr.mxu0 0.0
  %628 = vmatpush1.msra.mxu0 %v553
  %629 = vmatprep.subr.mxu0 0.0
  %630 = vmatpush1.msra.mxu0 %v554
  %631 = vmatprep.subr.mxu0 0.0
  %632 = vmatpush1.msra.mxu0 %v555
  %633 = vmatprep.subr.mxu0 0.0
  %634 = vmatpush1.msra.mxu0 %v556
  %635 = vmatprep.subr.mxu0 0.0
  %636 = vmatpush1.msra.mxu0 %v557
  %637 = vmatprep.subr.mxu0 0.0
  %638 = vmatpush1.msra.mxu0 %v558
  %639 = vmatprep.subr.mxu0 0.0
  %640 = vmatpush1.msra.mxu0 %v559
  %641 = vmatprep.subr.mxu0 0.0
  %642 = vmatpush1.msra.mxu0 %v560
  %643 = vmatprep.subr.mxu0 0.0
  %644 = vmatpush1.msra.mxu0 %v561
  %645 = vmatprep.subr.mxu0 0.0
  %646 = vmatpush1.msra.mxu0 %v562
  %647 = vmatprep.subr.mxu0 0.0
  %648 = vmatpush1.msra.mxu0 %v563
  %649 = vmatprep.subr.mxu0 0.0
  %650 = vmatpush1.msra.mxu0 %v564
  %651 = vmatprep.subr.mxu0 0.0
  %652 = vmatpush1.msra.mxu0 %v565
  %653 = vmatprep.subr.mxu0 0.0
  %654 = vmatpush1.msra.mxu0 %v566
  %655 = vmatprep.subr.mxu0 0.0
  %656 = vmatpush1.msra.mxu0 %v567
  %657 = vmatprep.subr.mxu0 0.0
  %658 = vmatpush1.msra.mxu0 %v568
  %659 = vmatprep.subr.mxu0 0.0
  %660 = vmatpush1.msra.mxu0 %v569
  %661 = vmatprep.subr.mxu0 0.0
  %662 = vmatpush1.msra.mxu0 %v570
  %663 = vmatprep.subr.mxu0 0.0
  %664 = vmatpush1.msra.mxu0 %v571
  %665 = vmatprep.subr.mxu0 0.0
  %666 = vmatpush1.msra.mxu0 %v572
  %667 = vmatprep.subr.mxu0 0.0
  %668 = vmatpush1.msra.mxu0 %v573
  %669 = vmatprep.subr.mxu0 0.0
  %670 = vmatpush1.msra.mxu0 %v574
  %671 = vmatprep.subr.mxu0 0.0
  %672 = vmatpush1.msra.mxu0 %v575
  %673 = vmatprep.subr.mxu0 0.0
  %674 = vmatpush1.msra.mxu0 %v576
  %675 = vmatprep.subr.mxu0 0.0
  %676 = vmatpush1.msra.mxu0 %v577
  %677 = vmatprep.subr.mxu0 0.0
  %678 = vmatpush1.msra.mxu0 %v578
  %679 = vmatprep.subr.mxu0 0.0
  %680 = vmatpush1.msra.mxu0 %v579
  %681 = vmatprep.subr.mxu0 0.0
  %682 = vmatpush1.msra.mxu0 %v580
  %683 = vmatprep.subr.mxu0 0.0
  %684 = vmatpush1.msra.mxu0 %v581
  %685 = vmatprep.mubr.f32.mxu0 %v543
  %686 = vmatmul.mubr.f32.gmra.mrb[0].mxu0 %v542
  %v687 = vpop.f32.mrb[0].mxu0
  %v688 = vadd.f32 %v619, %v687
  %v689 = vpop.f32.mrb[0].mxu0
  %690 = vmatprep.mubr.f32.mxu0 %v547
  %691 = vmatmul.mubr.f32.gmra.mrb[0].mxu0 %v546
  %v692 = vpop.f32.mrb[0].mxu0
  %v693 = vadd.f32 %v619, %v692
  %v694 = vpop.f32.mrb[0].mxu0
  %695 = vdwg.mxu0
  %696 = vmatprep.subr.mxu0 0.0
  %697 = vmatpush1.msra.mxu0 %v582
  %698 = vmatprep.subr.mxu0 0.0
  %699 = vmatpush1.msra.mxu0 %v583
  %700 = vmatprep.subr.mxu0 0.0
  %701 = vmatpush1.msra.mxu0 %v584
  %702 = vmatprep.subr.mxu0 0.0
  %703 = vmatpush1.msra.mxu0 %v585
  %704 = vmatprep.subr.mxu0 0.0
  %705 = vmatpush1.msra.mxu0 %v586
  %706 = vmatprep.subr.mxu0 0.0
  %707 = vmatpush1.msra.mxu0 %v587
  %708 = vmatprep.subr.mxu0 0.0
  %709 = vmatpush1.msra.mxu0 %v588
  %710 = vmatprep.subr.mxu0 0.0
  %711 = vmatpush1.msra.mxu0 %v589
  %712 = vmatprep.subr.mxu0 0.0
  %713 = vmatpush1.msra.mxu0 %v590
  %714 = vmatprep.subr.mxu0 0.0
  %715 = vmatpush1.msra.mxu0 %v591
  %716 = vmatprep.subr.mxu0 0.0
  %717 = vmatpush1.msra.mxu0 %v592
  %718 = vmatprep.subr.mxu0 0.0
  %719 = vmatpush1.msra.mxu0 %v593
  %720 = vmatprep.subr.mxu0 0.0
  %721 = vmatpush1.msra.mxu0 %v594
  %722 = vmatprep.subr.mxu0 0.0
  %723 = vmatpush1.msra.mxu0 %v595
  %724 = vmatprep.subr.mxu0 0.0
  %725 = vmatpush1.msra.mxu0 %v596
  %726 = vmatprep.subr.mxu0 0.0
  %727 = vmatpush1.msra.mxu0 %v597
  %728 = vmatprep.subr.mxu0 0.0
  %729 = vmatpush1.msra.mxu0 %v598
  %730 = vmatprep.subr.mxu0 0.0
  %731 = vmatpush1.msra.mxu0 %v599
  %732 = vmatprep.subr.mxu0 0.0
  %733 = vmatpush1.msra.mxu0 %v600
  %734 = vmatprep.subr.mxu0 0.0
  %735 = vmatpush1.msra.mxu0 %v601
  %736 = vmatprep.subr.mxu0 0.0
  %737 = vmatpush1.msra.mxu0 %v602
  %738 = vmatprep.subr.mxu0 0.0
  %739 = vmatpush1.msra.mxu0 %v603
  %740 = vmatprep.subr.mxu0 0.0
  %741 = vmatpush1.msra.mxu0 %v604
  %742 = vmatprep.subr.mxu0 0.0
  %743 = vmatpush1.msra.mxu0 %v605
  %744 = vmatprep.subr.mxu0 0.0
  %745 = vmatpush1.msra.mxu0 %v606
  %746 = vmatprep.subr.mxu0 0.0
  %747 = vmatpush1.msra.mxu0 %v607
  %748 = vmatprep.subr.mxu0 0.0
  %749 = vmatpush1.msra.mxu0 %v608
  %750 = vmatprep.subr.mxu0 0.0
  %751 = vmatpush1.msra.mxu0 %v609
  %752 = vmatprep.subr.mxu0 0.0
  %753 = vmatpush1.msra.mxu0 %v610
  %754 = vmatprep.subr.mxu0 0.0
  %755 = vmatpush1.msra.mxu0 %v611
  %756 = vmatprep.subr.mxu0 0.0
  %757 = vmatpush1.msra.mxu0 %v612
  %758 = vmatprep.subr.mxu0 0.0
  %759 = vmatpush1.msra.mxu0 %v613
  %760 = vmatprep.mubr.f32.mxu0 %v545
  %761 = vmatmul.mubr.f32.gmra.mrb[0].mxu0 %v544
  %v762 = vpop.f32.mrb[0].mxu0
  %v763 = vadd.f32 %v688, %v762
  %v764 = vpop.f32.mrb[0].mxu0
  %765 = vmatprep.mubr.f32.mxu0 %v549
  %766 = vmatmul.mubr.f32.gmra.mrb[0].mxu0 %v548
  %v767 = vpop.f32.mrb[0].mxu0
  %v768 = vadd.f32 %v693, %v767
  %v769 = vpop.f32.mrb[0].mxu0
  %770 = vdwg.mxu0
  %vm771 = vcmask 31744
  %v772 = vsel %vm771, %v763, -inf
  %773 = vmax.xlane.f32.xlu0 %v772
  %v774 = vpop.xlane.xlu0 %773
  %v775 = vsel %vm771, %v768, -inf
  %776 = vmax.xlane.f32.xlu0 %v775
  %v777 = vpop.xlane.xlu0 %776
  %v778 = vsub.f32 %v763, %v774
  %v779 = vsub.f32 %v768, %v777
  %v780 = vmul.f32 %v778, 1.442695
  %v781 = vpow.pop %v780
  %v782 = vmul.f32 %v779, 1.442695
  %v783 = vpow.pop %v782
  %v784 = vsel %vm771, %v781, 0.0
  %785 = vadd.xlane.f32.xlu0 %v784
  %v786 = vpop.xlane.xlu0 %785
  %v787 = vsel %vm771, %v783, 0.0
  %788 = vadd.xlane.f32.xlu0 %v787
  %v789 = vpop.xlane.xlu0 %788
  %v790 = vrcp.pop %v786
  %v791 = vmul.f32 %v781, %v790
  %v792 = vrcp.pop %v789
  %v793 = vmul.f32 %v783, %v792
  %794 = vst.msk [vmem:[%s11] sm:$0xff] %vm771, %v791
  %795 = vst.msk [vmem:[%s11 + $0x8] sm:$0xff] %vm771, %v793
  // Predicated region
  $region46: #{tpu_custom_call.1} parent=0 // pred_check
    _
  $region47: #{tpu_custom_call.1} parent=0 // pred_check_branch
    %797 = sbr.rel (0) target = $region49
  $region48: #{tpu_custom_call.1} parent=0 // pred_region
    _
  $region49: #{tpu_custom_call.1} parent=0 // pred_fallthru
    _
  // Predicated region
  $region50: #{tpu_custom_call.1} parent=0 // pred_check
    _
  $region51: #{tpu_custom_call.1} parent=0 // pred_check_branch
    %799 = sbr.rel (0) target = $region53
  $region52: #{tpu_custom_call.1} parent=0 // pred_region
    _
  $region53: #{tpu_custom_call.1} parent=0 // pred_fallthru
    _

</llo_original>
